<compile_context>
chip_gen: v7x
topology: tpu7x:2x2x1
jax: 0.10.0
libtpu: 0.0.40
codegen_flags: <defaults>
</compile_context>

<pallas_src>
import functools

import jax
import jax.numpy as jnp
from jax.experimental import pallas as pl
from jax.experimental.pallas import tpu as pltpu

_LANES = 128
# Clipping logits to +/- log((1-1e-5)/1e-5) is equivalent to clamping
# sigmoid(logits) to [1e-5, 1 - 1e-5].
_LOGIT_CLIP = 11.512915464920228


def _mixture_exp_kernel(scalars_ref, logits_ref, rho_ref, out_ref):
    # scalars: [exp(-beta), 1 - exp(-beta), -1/beta]  (precomputed in the wrapper)
    exp_neg_beta = scalars_ref[0]
    one_minus_a = scalars_ref[1]
    neg_inv_beta = scalars_ref[2]

    x = logits_ref[...].astype(jnp.float32)
    rho = rho_ref[...]

    # With Q = clamp(sigmoid(x), 1e-5, 1-1e-5):
    #   Q/(1-Q) = e   and   1/(1-Q) = 1 + e,   where e = exp(clip(x, +/-_LOGIT_CLIP))
    # so B and C need no sigmoid and no divides by (1-Q):
    #   B = rho*(1 - a)*(1 + e) + a*e - 1
    #   C = -a*e            (strictly negative -> discriminant > B^2, sqrt is safe)
    e = jnp.exp(jnp.clip(x, -_LOGIT_CLIP, _LOGIT_CLIP))
    ae = exp_neg_beta * e
    b = rho * (one_minus_a * (1.0 + e)) + ae - 1.0
    c = -ae

    disc = jnp.sqrt(b * b - 4.0 * c)
    # Numerically stable larger root of m^2 + b*m + c = 0:
    # avoid (-b + disc) cancellation when b > 0.
    m = jnp.where(b > 0.0, (-2.0 * c) / (b + disc), 0.5 * (disc - b))

    out_ref[...] = (neg_inv_beta * jnp.log(m)).astype(out_ref.dtype)


@functools.partial(jax.jit, static_argnames=("row_tile",))
def mixture_exp_mod(logits, beta, key, *, row_tile=512):
    """Pallas implementation of MixtureExpMod.forward(logits, beta).

    logits: float array, any shape.
    beta:   scalar temperature.
    key:    jax PRNG key for the uniform noise rho (torch.rand analogue).
    """
    orig_shape = logits.shape
    orig_dtype = logits.dtype
    total = logits.size

    # Lane-dense 2D slab; pad so rows is a multiple of the block row count.
    rows_raw = -(-total // _LANES)
    rows_pad8 = -(-rows_raw // 8) * 8
    if rows_pad8 <= row_tile:
        block_rows = rows_pad8
        rows = rows_pad8
    else:
        block_rows = row_tile
        rows = -(-rows_pad8 // row_tile) * row_tile
    grid = (rows // block_rows,)

    flat = jnp.ravel(logits).astype(jnp.float32)
    pad = rows * _LANES - total
    if pad:
        flat = jnp.concatenate([flat, jnp.zeros((pad,), jnp.float32)])
    x2d = flat.reshape(rows, _LANES)

    # rho ~ U[0, 1) over the padded slab (torch.rand analogue, generated host-graph side).
    rho2d = jax.random.uniform(key, (rows, _LANES), dtype=jnp.float32)

    # Hoist all beta-derived scalar work out of the kernel.
    beta_f = jnp.asarray(beta, jnp.float32)
    a = jnp.exp(-beta_f)
    scalars = jnp.stack([a, 1.0 - a, -1.0 / beta_f]).astype(jnp.float32)

    n = rows * _LANES
    cost = pl.CostEstimate(
        flops=20 * n,            # elementwise VPU work
        transcendentals=4 * n,   # exp, sqrt, log, one divide
        bytes_accessed=12 * n,   # logits + rho in, zeta out (f32)
    )

    out2d = pl.pallas_call(
        _mixture_exp_kernel,
        out_shape=jax.ShapeDtypeStruct((rows, _LANES), jnp.float32),
        grid=grid,
        in_specs=[
            pl.BlockSpec(memory_space=pltpu.SMEM),                  # beta scalars
            pl.BlockSpec((block_rows, _LANES), lambda i: (i, 0)),   # logits tile
            pl.BlockSpec((block_rows, _LANES), lambda i: (i, 0)),   # rho tile
        ],
        out_specs=pl.BlockSpec((block_rows, _LANES), lambda i: (i, 0)),
        compiler_params=pltpu.CompilerParams(
            # Fully elementwise with per-tile independence: shard across v7x's 2 TCs.
            dimension_semantics=("parallel",),
        ),
        cost_estimate=cost,
    )(scalars, x2d, rho2d)

    zeta = out2d.reshape(-1)[:total].reshape(orig_shape)
    return zeta.astype(orig_dtype)


def _reference_direct(logits, beta, rho):
    """Literal port of the PyTorch forward (direct, cancellation-prone root)."""
    q = jnp.clip(jax.nn.sigmoid(logits), 1e-5, 1.0 - 1e-5)
    a = jnp.exp(-beta)
    b = (rho + a * (q - rho)) / (1.0 - q) - 1.0
    c = -(q * a) / (1.0 - q)
    m = (-b + jnp.sqrt(b * b - 4.0 * c)) / 2.0
    return (-1.0 / beta) * jnp.log(m)


def _reference_stable(logits, beta, rho):
    """Same math as the kernel (clip on logits + stable root), in plain JAX."""
    a = jnp.exp(-beta)
    e = jnp.exp(jnp.clip(logits, -_LOGIT_CLIP, _LOGIT_CLIP))
    ae = a * e
    b = rho * ((1.0 - a) * (1.0 + e)) + ae - 1.0
    c = -ae
    disc = jnp.sqrt(b * b - 4.0 * c)
    m = jnp.where(b > 0.0, (-2.0 * c) / (b + disc), 0.5 * (disc - b))
    return (-1.0 / beta) * jnp.log(m)


if __name__ == "__main__":
    key = jax.random.PRNGKey(0)
    k_logits, k_rho = jax.random.split(key)

    # Small NCHW logits tensor: batch=2, channels=4, spatial=16x16.
    logits = jax.random.normal(k_logits, (2, 4, 16, 16), dtype=jnp.float32)
    beta = 10.0

    zeta = mixture_exp_mod(logits, beta, k_rho)
    zeta = jax.block_until_ready(zeta)

    # Reproduce the exact rho stream the wrapper drew (no padding for this shape).
    rho = jax.random.uniform(k_rho, (logits.size // _LANES, _LANES), dtype=jnp.float32)
    rho = rho.reshape(logits.shape)

    ref_stable = _reference_stable(logits, beta, rho)
    ref_direct = _reference_direct(logits, beta, rho)

    ok = zeta.shape == logits.shape
    ok = ok and bool(jnp.all(jnp.isfinite(zeta)))
    # zeta of the smoothed exponential mixture lies in [0, 1).
    ok = ok and bool(jnp.all(zeta > -1e-4)) and bool(jnp.all(zeta < 1.0 + 1e-4))
    # Tight check against the mathematically-identical stable formulation.
    ok = ok and bool(jnp.allclose(zeta, ref_stable, rtol=1e-4, atol=1e-4))
    # Loose check against the literal PyTorch formulation (its direct root loses
    # precision in f32 when B is large, so only coarse agreement is expected).
    ok = ok and bool(jnp.allclose(zeta, ref_direct, rtol=1e-1, atol=2e-2))

    print("KERNEL_OK" if ok else "KERNEL_MISMATCH")
</pallas_src>

<mosaic_0001>
module attributes {stable_mosaic.version = 11 : i64} {
  func.func @_mixture_exp_kernel(%arg0: i32, %arg1: memref<3xf32, #tpu.memory_space<smem>>, %arg2: memref<16x128xf32, #tpu.memory_space<vmem>>, %arg3: memref<16x128xf32, #tpu.memory_space<vmem>>, %arg4: memref<16x128xf32, #tpu.memory_space<vmem>>) attributes {dimension_semantics = [#tpu.dimension_semantics<parallel>], iteration_bounds = array<i64: 1>, scalar_prefetch = 0 : i64, scratch_operands = 0 : i64, tpu.core_type = #tpu.core_type<tc>, window_params = [{transform_indices = @transform_0, window_bounds = array<i64: 3>}, {transform_indices = @transform_1, window_bounds = array<i64: 16, 128>}, {transform_indices = @transform_2, window_bounds = array<i64: 16, 128>}, {transform_indices = @transform_3, window_bounds = array<i64: 16, 128>}]} {
    %c0 = arith.constant 0 : index
    %0 = memref.load %arg1[%c0] : memref<3xf32, #tpu.memory_space<smem>>
    %c1 = arith.constant 1 : index
    %1 = memref.load %arg1[%c1] : memref<3xf32, #tpu.memory_space<smem>>
    %c2 = arith.constant 2 : index
    %2 = memref.load %arg1[%c2] : memref<3xf32, #tpu.memory_space<smem>>
    %c0_0 = arith.constant 0 : index
    %c0_1 = arith.constant 0 : index
    %3 = vector.load %arg2[%c0_0, %c0_1] : memref<16x128xf32, #tpu.memory_space<vmem>>, vector<16x128xf32>
    %c0_2 = arith.constant 0 : index
    %c0_3 = arith.constant 0 : index
    %4 = vector.load %arg3[%c0_2, %c0_3] : memref<16x128xf32, #tpu.memory_space<vmem>>, vector<16x128xf32>
    %cst = arith.constant -11.5129156 : f32
    %cst_4 = arith.constant 11.5129156 : f32
    %5 = vector.broadcast %cst : f32 to vector<16x128xf32>
    %6 = arith.maximumf %5, %3 : vector<16x128xf32>
    %7 = vector.broadcast %cst_4 : f32 to vector<16x128xf32>
    %8 = arith.minimumf %7, %6 : vector<16x128xf32>
    %9 = math.exp %8 : vector<16x128xf32>
    %10 = vector.broadcast %0 : f32 to vector<16x128xf32>
    %11 = arith.mulf %10, %9 : vector<16x128xf32>
    %cst_5 = arith.constant 1.000000e+00 : f32
    %12 = vector.broadcast %cst_5 : f32 to vector<16x128xf32>
    %13 = arith.addf %12, %9 : vector<16x128xf32>
    %14 = vector.broadcast %1 : f32 to vector<16x128xf32>
    %15 = arith.mulf %14, %13 : vector<16x128xf32>
    %16 = arith.mulf %4, %15 : vector<16x128xf32>
    %17 = arith.addf %16, %11 : vector<16x128xf32>
    %cst_6 = arith.constant 1.000000e+00 : f32
    %18 = vector.broadcast %cst_6 : f32 to vector<16x128xf32>
    %19 = arith.subf %17, %18 : vector<16x128xf32>
    %cst_7 = arith.constant 0.000000e+00 : f32
    %20 = vector.broadcast %cst_7 : f32 to vector<16x128xf32>
    %21 = arith.subf %20, %11 : vector<16x128xf32>
    %22 = arith.mulf %19, %19 : vector<16x128xf32>
    %cst_8 = arith.constant 4.000000e+00 : f32
    %23 = vector.broadcast %cst_8 : f32 to vector<16x128xf32>
    %24 = arith.mulf %23, %21 : vector<16x128xf32>
    %25 = arith.subf %22, %24 : vector<16x128xf32>
    %26 = math.sqrt %25 : vector<16x128xf32>
    %cst_9 = arith.constant 0.000000e+00 : f32
    %27 = vector.broadcast %cst_9 : f32 to vector<16x128xf32>
    %28 = arith.cmpf ogt, %19, %27 : vector<16x128xf32>
    %cst_10 = arith.constant -2.000000e+00 : f32
    %29 = vector.broadcast %cst_10 : f32 to vector<16x128xf32>
    %30 = arith.mulf %29, %21 : vector<16x128xf32>
    %31 = arith.addf %19, %26 : vector<16x128xf32>
    %32 = arith.divf %30, %31 : vector<16x128xf32>
    %33 = arith.subf %26, %19 : vector<16x128xf32>
    %cst_11 = arith.constant 5.000000e-01 : f32
    %34 = vector.broadcast %cst_11 : f32 to vector<16x128xf32>
    %35 = arith.mulf %34, %33 : vector<16x128xf32>
    %36 = arith.select %28, %32, %35 : vector<16x128xi1>, vector<16x128xf32>
    %37 = math.log %36 : vector<16x128xf32>
    %38 = vector.broadcast %2 : f32 to vector<16x128xf32>
    %39 = arith.mulf %38, %37 : vector<16x128xf32>
    %c0_12 = arith.constant 0 : index
    %c0_13 = arith.constant 0 : index
    %40 = vector.load %arg4[%c0_12, %c0_13] : memref<16x128xf32, #tpu.memory_space<vmem>>, vector<16x128xf32>
    tpu.vector_store %arg4[%c0_12, %c0_13], %39 {strides = array<i32>} : memref<16x128xf32, #tpu.memory_space<vmem>>, vector<16x128xf32>,
    return
  }
  func.func @transform_0(%arg0: i32) -> i32 {
    %c0_i32 = arith.constant 0 : i32
    %c0_i32_0 = arith.constant 0 : i32
    return %c0_i32 : i32
  }
  func.func @transform_1(%arg0: i32) -> (i32, i32) {
    %c0_i32 = arith.constant 0 : i32
    %c0_i32_0 = arith.constant 0 : i32
    return %arg0, %c0_i32 : i32, i32
  }
  func.func @transform_2(%arg0: i32) -> (i32, i32) {
    %c0_i32 = arith.constant 0 : i32
    %c0_i32_0 = arith.constant 0 : i32
    return %arg0, %c0_i32 : i32, i32
  }
  func.func @transform_3(%arg0: i32) -> (i32, i32) {
    %c0_i32 = arith.constant 0 : i32
    %c0_i32_0 = arith.constant 0 : i32
    return %arg0, %c0_i32 : i32, i32
  }
}

</mosaic_0001>

<llo_original>
// kernel: mixture_exp_mod.1
$region0: #{mixture_exp_mod.1}
  #allocation0 [shape = 'u32[]', space=smem, size = 0x4, offset = 0x4, fixed_abs, tag = 'smem constant byte address 0x4 - core index']
  #allocation1 [shape = 'u32[144,128]{1,0:T(1,128)}', space=vmem, size = 0x12000, scoped, tag = 'internal scratch']
  %s0 = inlined_call_operand.vmem [shape: f32[3], index: 0, kind: input, shape index: {}]
  %s1 = inlined_call_operand.vmem [shape: f32[16,128], index: 1, kind: input, shape index: {}]
  %s2 = inlined_call_operand.vmem [shape: f32[16,128], index: 2, kind: input, shape index: {}]
  %s3 = inlined_call_operand.vmem [shape: f32[16,128], index: 3, kind: output, shape index: {}]
  %s4 = sld [smem:[#allocation0]]
  $region26: #{mixture_exp_mod.1} parent=0
    _
  %s6 = ssub.s32 1, %s4
  %s7 = scalar_select 0, %s6, %s4
  $region1: #{mixture_exp_mod.1} parent=0
    #allocation2 [shape = 'u8[512]{0}', space=smem, size = 0x200, scoped, tag = 'input window, operand 0, single buffered']
    #allocation3 [shape = 's32[1]{0}', space=sflag, size = 0x4, scoped, tag = 'scoped memory for mixture_exp_mod.1']
    %8 = vsyncpa [#allocation3], 0
    // Predicated region
    $region2: #{mixture_exp_mod.1} parent=1 // pred_check
      _
    $region3: #{mixture_exp_mod.1} parent=1 // pred_check_branch
      %10 = sbr.rel (0) target = $region5
    $region4: #{mixture_exp_mod.1} parent=1 // pred_region
      %s12 = ssub.s32 16, 16
      %13 = vsyncadd [#allocation3], %s12
      %s15 = sshll.u32 %s0, 4
      %s16 = int_to_ptr.vmem [resolvable:$true] %s15
      %18 = dma.vmem_to_smem %s16, 16, [#allocation2], [#allocation3]
    $region5: #{mixture_exp_mod.1} parent=1 // pred_fallthru
      _
    // Predicated region
    $region6: #{mixture_exp_mod.1} parent=1 // pred_check
      _
    $region7: #{mixture_exp_mod.1} parent=1 // pred_check_branch
      %20 = sbr.rel (0) target = $region9
    $region8: #{mixture_exp_mod.1} parent=1 // pred_region
      _
    $region9: #{mixture_exp_mod.1} parent=1 // pred_fallthru
      _
    // Predicated region
    $region10: #{mixture_exp_mod.1} parent=1 // pred_check
      _
    $region11: #{mixture_exp_mod.1} parent=1 // pred_check_branch
      %22 = sbr.rel (0) target = $region13
    $region12: #{mixture_exp_mod.1} parent=1 // pred_region
      _
    $region13: #{mixture_exp_mod.1} parent=1 // pred_fallthru
      _
    // Predicated region
    $region14: #{mixture_exp_mod.1} parent=1 // pred_check
      _
    $region15: #{mixture_exp_mod.1} parent=1 // pred_check_branch
      %24 = sbr.rel (0) target = $region17
    $region16: #{mixture_exp_mod.1} parent=1 // pred_region
      %25 = dma.done [#allocation3], 16
    $region17: #{mixture_exp_mod.1} parent=1 // pred_fallthru
      _
    %26 = sfence
    %s27 = sld [smem:[#allocation2]]
    %s28 = sld [smem:[#allocation2 + $0x1]]
    %s29 = sld [smem:[#allocation2 + $0x2]]
    %v30 = vld [vmem:[%s1] sm:$0xff]
    %v31 = vld [vmem:[%s1 + $0x8] sm:$0xff]
    %v32 = vld [vmem:[%s2] sm:$0xff]
    %v33 = vld [vmem:[%s2 + $0x8] sm:$0xff]
    %v34 = vmax.f32 %v30, -11.512916
    %v35 = vmax.f32 %v31, -11.512916
    %v36 = vmin.f32 %v34, 11.512916
    %v37 = vmin.f32 %v35, 11.512916
    %v38 = vmul.f32 %v36, 1.442695
    %v39 = vpow.pop %v38
    %v40 = vmul.f32 %v37, 1.442695
    %v41 = vpow.pop %v40
    %v42 = vstv %s27
    %v43 = vmul.f32 %v42, %v39
    %v44 = vmul.f32 %v42, %v41
    %v45 = vadd.f32 %v39, 1.0
    %v46 = vadd.f32 %v41, 1.0
    %v47 = vstv %s28
    %v48 = vmul.f32 %v47, %v45
    %v49 = vmul.f32 %v47, %v46
    %v50 = vmul.f32 %v32, %v48
    %v51 = vmul.f32 %v33, %v49
    %v52 = vadd.f32 %v50, %v43
    %v53 = vadd.f32 %v51, %v44
    %v54 = vsub.f32 %v52, 1.0
    %v55 = vsub.f32 %v53, 1.0
    %v56 = vsub.f32 0.0, %v43
    %v57 = vsub.f32 0.0, %v44
    %v58 = vmul.f32 %v54, %v54
    %v59 = vmul.f32 %v55, %v55
    %v60 = vmul.f32 %v56, 4.0
    %v61 = vmul.f32 %v57, 4.0
    %v62 = vsub.f32 %v58, %v60
    %v63 = vsub.f32 %v59, %v61
    %v64 = vrsqrt.pop %v62
    %v65 = vmul.f32 %v62, %v64
    %vm66 = vcmp.eq.f32.partialorder %v62, inf
    %v67 = vsel %vm66, %v62, %v65
    %vm68 = vcmp.eq.f32.partialorder %v62, 0.0
    %v69 = vand.u32 %v62, 2147483648
    %v70 = vsel %vm68, %v69, %v67
    %v71 = vrsqrt.pop %v63
    %v72 = vmul.f32 %v63, %v71
    %vm73 = vcmp.eq.f32.partialorder %v63, inf
    %v74 = vsel %vm73, %v63, %v72
    %vm75 = vcmp.eq.f32.partialorder %v63, 0.0
    %v76 = vand.u32 %v63, 2147483648
    %v77 = vsel %vm75, %v76, %v74
    %vm78 = vcmp.gt.f32.partialorder %v54, 0.0
    %vm79 = vcmp.gt.f32.partialorder %v55, 0.0
    %v80 = vmul.f32 %v56, -2.0
    %v81 = vmul.f32 %v57, -2.0
    %v82 = vadd.f32 %v54, %v70
    %v83 = vadd.f32 %v55, %v77
    %v84 = vrcp.pop %v82
    %v85 = vmul.f32 %v80, %v84
    %v86 = vrcp.pop %v83
    %v87 = vmul.f32 %v81, %v86
    %v88 = vsub.f32 %v70, %v54
    %v89 = vsub.f32 %v77, %v55
    %v90 = vmul.f32 %v88, 0.5
    %v91 = vmul.f32 %v89, 0.5
    %v92 = vsel %vm78, %v85, %v90
    %v93 = vsel %vm79, %v87, %v91
    %v94 = vlog2.pop %v92
    %v95 = vmul.f32 %v94, 0.6931472
    %v96 = vlog2.pop %v93
    %v97 = vmul.f32 %v96, 0.6931472
    %v98 = vstv %s29
    %v99 = vmul.f32 %v98, %v95
    %v100 = vmul.f32 %v98, %v97
    %101 = vst [vmem:[%s3] sm:$0xff] %v99
    %102 = vst [vmem:[%s3 + $0x8] sm:$0xff] %v100
    // Predicated region
    $region18: #{mixture_exp_mod.1} parent=1 // pred_check
      _
    $region19: #{mixture_exp_mod.1} parent=1 // pred_check_branch
      %104 = sbr.rel (0) target = $region21
    $region20: #{mixture_exp_mod.1} parent=1 // pred_region
      _
    $region21: #{mixture_exp_mod.1} parent=1 // pred_fallthru
      _
    // Predicated region
    $region22: #{mixture_exp_mod.1} parent=1 // pred_check
      _
    $region23: #{mixture_exp_mod.1} parent=1 // pred_check_branch
      %106 = sbr.rel (0) target = $region25
    $region24: #{mixture_exp_mod.1} parent=1 // pred_region
      _
    $region25: #{mixture_exp_mod.1} parent=1 // pred_fallthru
      _
    %107 = vsyncpa [#allocation3], 1

</llo_original>
